<compile_context>
chip_gen: v5e
topology: v5e:2x2
jax: 0.10.0
libtpu: 0.0.40
codegen_flags: <defaults>
</compile_context>

<pallas_src>
import jax
import jax.numpy as jnp
from jax.experimental import pallas as pl
from jax.experimental.pallas import tpu as pltpu

EPSILON = float(jnp.finfo(jnp.float32).eps)


def _supernet_kernel(lam_ref, h0_ref, x_ref, w1t_ref, w2t_ref, out_ref, h_carry):
    """One SuperLayer per grid step; grid axis 0 = layer index.

    lam_ref : SMEM (2,) float32            -> [lambda1, lambda2]
    h0_ref  : VMEM (batch, comp)            initial factor estimate (layer 0 only)
    x_ref   : VMEM (batch, features)        data matrix (resident across layers)
    w1t_ref : VMEM (comp, comp)             fc1.weight.T for this layer
    w2t_ref : VMEM (features, comp)         fc2.weight.T for this layer
    out_ref : VMEM (batch, comp)            resident output block (constant index)
    h_carry : VMEM scratch (batch, comp)    h carried across layers in VMEM
    """
    layer = pl.program_id(0)

    @pl.when(layer == 0)
    def _():
        h_carry[...] = h0_ref[...]

    l1 = lam_ref[0]
    l2 = lam_ref[1]
    h = h_carry[...]

    # numerator = fc2(x) = x @ W2.T   (weights pre-transposed once in wrapper)
    num = jnp.dot(x_ref[...], w2t_ref[...], preferred_element_type=jnp.float32)
    # denominator = fc1(h) + l2*h + l1 + EPS
    den = (
        jnp.dot(h, w1t_ref[...], preferred_element_type=jnp.float32)
        + l2 * h
        + l1
        + EPSILON
    )
    h_new = (num / den) * h

    h_carry[...] = h_new
    # Output block index is constant across the layer axis, so this block stays
    # resident in VMEM and is flushed to HBM once when the grid finishes.
    out_ref[...] = h_new


@jax.jit
def super_net_forward(h, x, w1_stack, w2_stack, lam1, lam2):
    """SuperNet.forward: all layers fused into a single pallas_call.

    h        : (batch, comp)
    x        : (batch, features)
    w1_stack : (n_layers, comp, comp)       PyTorch Linear layout (out, in)
    w2_stack : (n_layers, comp, features)   PyTorch Linear layout (out, in)
    """
    n_layers = w1_stack.shape[0]
    batch, comp = h.shape
    features = x.shape[1]

    lams = jnp.stack(
        [
            jnp.asarray(lam1, jnp.float32).reshape(()),
            jnp.asarray(lam2, jnp.float32).reshape(()),
        ]
    )
    # Hoisted: transpose the whole weight stacks once (not per layer).
    w1t_stack = jnp.transpose(w1_stack, (0, 2, 1))  # (n_layers, comp, comp)
    w2t_stack = jnp.transpose(w2_stack, (0, 2, 1))  # (n_layers, features, comp)

    # TODO(synk): for large batch, add a leading "parallel" batch-tile grid axis
    # (and the lane-dense (comp, batch) layout) per the perf review; at these
    # small shapes the fused layer loop is the whole win.
    return pl.pallas_call(
        _supernet_kernel,
        out_shape=jax.ShapeDtypeStruct((batch, comp), jnp.float32),
        grid=(n_layers,),
        in_specs=[
            pl.BlockSpec(memory_space=pltpu.MemorySpace.SMEM),          # lambdas
            pl.BlockSpec((batch, comp), lambda l: (0, 0)),              # h0 (DMA once)
            pl.BlockSpec((batch, features), lambda l: (0, 0)),          # x  (DMA once)
            pl.BlockSpec((None, comp, comp), lambda l: (l, 0, 0)),      # W1^T per layer
            pl.BlockSpec((None, features, comp), lambda l: (l, 0, 0)),  # W2^T per layer
        ],
        out_specs=pl.BlockSpec((batch, comp), lambda l: (0, 0)),
        scratch_shapes=[pltpu.VMEM((batch, comp), jnp.float32)],
        compiler_params=pltpu.CompilerParams(
            dimension_semantics=("arbitrary",)  # layer axis is a sequential carry
        ),
    )(lams, h, x, w1t_stack, w2t_stack)


def _reference_forward(h, x, w1_stack, w2_stack, lam1, lam2):
    """Pure-JAX reference mirroring the PyTorch module exactly."""
    for i in range(w1_stack.shape[0]):
        den = h @ w1_stack[i].T + lam2 * h + lam1 + EPSILON
        num = x @ w2_stack[i].T
        h = (num / den) * h
    return h


if __name__ == "__main__":
    # Small shapes implied by the module: (batch, comp) factor, (batch, features) data.
    n_layers = 3
    batch = 2
    comp = 8
    features = 32

    key = jax.random.PRNGKey(0)
    k_h, k_x, k_w1, k_w2 = jax.random.split(key, 4)

    # Nonnegative inputs (NMF setting) so the multiplicative update is well-behaved.
    h0 = jax.random.uniform(k_h, (batch, comp), jnp.float32, minval=0.1, maxval=1.0)
    x = jax.random.uniform(k_x, (batch, features), jnp.float32, minval=0.1, maxval=1.0)

    # Deterministic per-layer weights (PyTorch Linear weight layout: (out, in)).
    w1_stack = jax.random.uniform(
        k_w1, (n_layers, comp, comp), jnp.float32, minval=0.0, maxval=0.5
    )
    w2_stack = jax.random.uniform(
        k_w2, (n_layers, comp, features), jnp.float32, minval=0.0, maxval=0.5
    )

    # L1=True, L2=True -> both lambdas initialized to ones(1) and shared across layers.
    lam1 = jnp.float32(1.0)
    lam2 = jnp.float32(1.0)

    out = super_net_forward(h0, x, w1_stack, w2_stack, lam1, lam2)
    out = jax.block_until_ready(out)

    ref = _reference_forward(h0, x, w1_stack, w2_stack, lam1, lam2)
    assert out.shape == (batch, comp)
    assert jnp.allclose(out, ref, rtol=1e-5, atol=1e-5), "mismatch vs JAX reference"

    print("KERNEL_OK")
</pallas_src>

<mosaic_0001>
module attributes {stable_mosaic.version = 11 : i64} {
  func.func @_supernet_kernel(%arg0: i32, %arg1: memref<2xf32, #tpu.memory_space<smem>>, %arg2: memref<2x8xf32, #tpu.memory_space<vmem>>, %arg3: memref<2x32xf32, #tpu.memory_space<vmem>>, %arg4: memref<1x8x8xf32, #tpu.memory_space<vmem>>, %arg5: memref<1x32x8xf32, #tpu.memory_space<vmem>>, %arg6: memref<2x8xf32, #tpu.memory_space<vmem>>, %arg7: memref<2x8xf32, #tpu.memory_space<vmem>>) attributes {dimension_semantics = [#tpu.dimension_semantics<arbitrary>], iteration_bounds = array<i64: 3>, scalar_prefetch = 0 : i64, scratch_operands = 1 : i64, tpu.core_type = #tpu.core_type<tc>, window_params = [{transform_indices = @transform_0, window_bounds = array<i64: 2>}, {pipeline_mode = #tpu.pipeline_mode<synchronous>, transform_indices = @transform_1, window_bounds = array<i64: 2, 8>}, {pipeline_mode = #tpu.pipeline_mode<synchronous>, transform_indices = @transform_2, window_bounds = array<i64: 2, 32>}, {transform_indices = @transform_3, window_bounds = array<i64: 1, 8, 8>}, {transform_indices = @transform_4, window_bounds = array<i64: 1, 32, 8>}, {pipeline_mode = #tpu.pipeline_mode<synchronous>, transform_indices = @transform_5, window_bounds = array<i64: 2, 8>}]} {
    %c0_i32 = arith.constant 0 : i32
    %0 = arith.cmpi eq, %arg0, %c0_i32 : i32
    %1 = arith.extui %0 : i1 to i32
    %c0_i32_0 = arith.constant 0 : i32
    %2 = arith.cmpi ne, %1, %c0_i32_0 : i32
    scf.if %2 {
      %c0_17 = arith.constant 0 : index
      %c0_18 = arith.constant 0 : index
      %24 = vector.load %arg2[%c0_17, %c0_18] : memref<2x8xf32, #tpu.memory_space<vmem>>, vector<2x8xf32>
      %c0_19 = arith.constant 0 : index
      %c0_20 = arith.constant 0 : index
      %25 = vector.load %arg7[%c0_19, %c0_20] : memref<2x8xf32, #tpu.memory_space<vmem>>, vector<2x8xf32>
      tpu.vector_store %arg7[%c0_19, %c0_20], %24 {strides = array<i32>} : memref<2x8xf32, #tpu.memory_space<vmem>>, vector<2x8xf32>,
    } else {
    }
    %c0 = arith.constant 0 : index
    %3 = memref.load %arg1[%c0] : memref<2xf32, #tpu.memory_space<smem>>
    %c1 = arith.constant 1 : index
    %4 = memref.load %arg1[%c1] : memref<2xf32, #tpu.memory_space<smem>>
    %c0_1 = arith.constant 0 : index
    %c0_2 = arith.constant 0 : index
    %5 = vector.load %arg7[%c0_1, %c0_2] : memref<2x8xf32, #tpu.memory_space<vmem>>, vector<2x8xf32>
    %c0_3 = arith.constant 0 : index
    %c0_4 = arith.constant 0 : index
    %6 = vector.load %arg3[%c0_3, %c0_4] : memref<2x32xf32, #tpu.memory_space<vmem>>, vector<2x32xf32>
    %c0_5 = arith.constant 0 : index
    %c0_6 = arith.constant 0 : index
    %c0_7 = arith.constant 0 : index
    %7 = vector.load %arg5[%c0_5, %c0_6, %c0_7] : memref<1x32x8xf32, #tpu.memory_space<vmem>>, vector<1x32x8xf32>
    %8 = vector.shape_cast %7 : vector<1x32x8xf32> to vector<32x8xf32>
    %cst = arith.constant dense<0.000000e+00> : vector<2x8xf32>
    %9 = tpu.matmul %6, %8, %cst {dimension_numbers = #tpu.dot_dimension_numbers<[1], [0], [0], [1], [0, 0, 1, 1], [], []>} : vector<2x32xf32>, vector<32x8xf32>, vector<2x8xf32> -> vector<2x8xf32>
    %c0_8 = arith.constant 0 : index
    %c0_9 = arith.constant 0 : index
    %c0_10 = arith.constant 0 : index
    %10 = vector.load %arg4[%c0_8, %c0_9, %c0_10] : memref<1x8x8xf32, #tpu.memory_space<vmem>>, vector<1x8x8xf32>
    %11 = vector.shape_cast %10 : vector<1x8x8xf32> to vector<8x8xf32>
    %cst_11 = arith.constant dense<0.000000e+00> : vector<2x8xf32>
    %12 = tpu.matmul %5, %11, %cst_11 {dimension_numbers = #tpu.dot_dimension_numbers<[1], [0], [0], [1], [0, 0, 1, 1], [], []>} : vector<2x8xf32>, vector<8x8xf32>, vector<2x8xf32> -> vector<2x8xf32>
    %13 = vector.broadcast %4 : f32 to vector<2x8xf32>
    %14 = arith.mulf %13, %5 : vector<2x8xf32>
    %15 = arith.addf %12, %14 : vector<2x8xf32>
    %16 = vector.broadcast %3 : f32 to vector<2x8xf32>
    %17 = arith.addf %15, %16 : vector<2x8xf32>
    %cst_12 = arith.constant 1.1920929E-7 : f32
    %18 = vector.broadcast %cst_12 : f32 to vector<2x8xf32>
    %19 = arith.addf %17, %18 : vector<2x8xf32>
    %20 = arith.divf %9, %19 : vector<2x8xf32>
    %21 = arith.mulf %20, %5 : vector<2x8xf32>
    %c0_13 = arith.constant 0 : index
    %c0_14 = arith.constant 0 : index
    %22 = vector.load %arg7[%c0_13, %c0_14] : memref<2x8xf32, #tpu.memory_space<vmem>>, vector<2x8xf32>
    tpu.vector_store %arg7[%c0_13, %c0_14], %21 {strides = array<i32>} : memref<2x8xf32, #tpu.memory_space<vmem>>, vector<2x8xf32>,
    %c0_15 = arith.constant 0 : index
    %c0_16 = arith.constant 0 : index
    %23 = vector.load %arg6[%c0_15, %c0_16] : memref<2x8xf32, #tpu.memory_space<vmem>>, vector<2x8xf32>
    tpu.vector_store %arg6[%c0_15, %c0_16], %21 {strides = array<i32>} : memref<2x8xf32, #tpu.memory_space<vmem>>, vector<2x8xf32>,
    return
  }
  func.func @transform_0(%arg0: i32) -> i32 {
    %c0_i32 = arith.constant 0 : i32
    %c0_i32_0 = arith.constant 0 : i32
    return %c0_i32 : i32
  }
  func.func @transform_1(%arg0: i32) -> (i32, i32) {
    %c0_i32 = arith.constant 0 : i32
    %c0_i32_0 = arith.constant 0 : i32
    %c0_i32_1 = arith.constant 0 : i32
    return %c0_i32, %c0_i32_0 : i32, i32
  }
  func.func @transform_2(%arg0: i32) -> (i32, i32) {
    %c0_i32 = arith.constant 0 : i32
    %c0_i32_0 = arith.constant 0 : i32
    %c0_i32_1 = arith.constant 0 : i32
    return %c0_i32, %c0_i32_0 : i32, i32
  }
  func.func @transform_3(%arg0: i32) -> (i32, i32, i32) {
    %c0_i32 = arith.constant 0 : i32
    %c0_i32_0 = arith.constant 0 : i32
    %c0_i32_1 = arith.constant 0 : i32
    return %arg0, %c0_i32, %c0_i32_0 : i32, i32, i32
  }
  func.func @transform_4(%arg0: i32) -> (i32, i32, i32) {
    %c0_i32 = arith.constant 0 : i32
    %c0_i32_0 = arith.constant 0 : i32
    %c0_i32_1 = arith.constant 0 : i32
    return %arg0, %c0_i32, %c0_i32_0 : i32, i32, i32
  }
  func.func @transform_5(%arg0: i32) -> (i32, i32) {
    %c0_i32 = arith.constant 0 : i32
    %c0_i32_0 = arith.constant 0 : i32
    %c0_i32_1 = arith.constant 0 : i32
    return %c0_i32, %c0_i32_0 : i32, i32
  }
}

</mosaic_0001>

<llo_original>
// kernel: super_net_forward.1
$region0: #{super_net_forward.1}
  #allocation0 [shape = 'u32[]', space=smem, size = 0x4, offset = 0x4, fixed_abs, tag = 'smem constant byte address 0x4 - core index']
  #allocation1 [shape = 'u32[72,128]{1,0:T(1,128)}', space=vmem, size = 0x9000, scoped, tag = 'internal scratch']
  #allocation2 [shape = 'f32[2,8]{1,0:T(2,128)}', space=vmem, size = 0x400, scoped, tag = 'scratch operand']
  %s0 = inlined_call_operand.vmem [shape: f32[2], index: 0, kind: input, shape index: {}]
  %s1 = inlined_call_operand.vmem [shape: f32[2,8], index: 1, kind: input, shape index: {}]
  %s2 = inlined_call_operand.vmem [shape: f32[2,32], index: 2, kind: input, shape index: {}]
  %s3 = inlined_call_operand.vmem [shape: f32[3,8,8], index: 3, kind: input, shape index: {}]
  %s4 = inlined_call_operand.vmem [shape: f32[3,32,8], index: 4, kind: input, shape index: {}]
  %s5 = inlined_call_operand.hbm [shape: f32[2,8], index: 5, kind: output, shape index: {}]
  %s6 = sld [smem:[#allocation0]]
  $region61: #{super_net_forward.1} parent=0
    _
  %s8 = ssub.s32 1, %s6
  %s9 = scalar_select 0, %s8, %s6
  $region1: #{super_net_forward.1} parent=0
    #allocation3 [shape = 'u8[512]{0}', space=smem, size = 0x200, scoped, tag = 'input window, operand 0, single buffered']
    #allocation4 [shape = 's32[2]{0}', space=sflag, size = 0x8, scoped, tag = 'scoped memory for super_net_forward.1']
    #allocation5 [shape = 's32[2]{0}', space=sflag, size = 0x8, scoped, tag = 'scoped memory for super_net_forward.1']
    #allocation6 [shape = 'u8[1024]{0}', space=vmem, size = 0x400, scoped, tag = 'output window, operand 0, single buffered']
    %10 = vsyncpa [#allocation5], 0
    %11 = vsyncpa [#allocation4], 0
    loop: start=0, step=1, limit=5
    $region2: #{super_net_forward.1} parent=1 // loop_pre_header
      _
    $region3: #{super_net_forward.1} parent=1 // loop_header
      %s13 = sphi 0, %s17
      %p14 = scmp.ge.s32.totalorder %s13, 5
      %s21 = sphi 0, %s21
      %s23 = sphi 0, %s21
      %s24 = sphi 0, %s23
      %s38 = sphi 0, %s24
      %s42 = sphi 0, %s42
      %s44 = sphi 0, %s42
      %s45 = sphi 0, %s44
      %s59 = sphi 0, %s45
      %s63 = sphi 0, %s63
      %s65 = sphi 0, %s63
      %s66 = sphi 0, %s65
      %s80 = sphi 0, %s66
      %s86 = sphi 0, %s88
      %s89 = sphi 0, %s86
      %s90 = sphi 0, %s89
      %s106 = sphi 0, %s90
      %s112 = sphi 0, %s114
      %s115 = sphi 0, %s112
      %s116 = sphi 0, %s115
      %s132 = sphi 0, %s116
      %s136 = sphi 0, %s136
      %s138 = sphi 0, %s136
      %s139 = sphi 0, %s138
      %s153 = sphi 0, %s139
    $region4: #{super_net_forward.1} parent=1 // loop_header_branch
      %16 = sbr.rel (%p14) target = $region8
    $region5: #{super_net_forward.1} parent=1 // loop_body
      %s18 = ssub.s32 %s13, 1
      %s19 = ssub.s32 %s13, 2
      %s20 = sadd.s32 %s13, 1
      %s22 = sadd.s32 %s21, 1
      %p25 = scmp.eq.s32.totalorder %s13, 2
      %p26 = scmp.ne.s32.totalorder %s21, %s23
      %p27 = scmp.eq.s32.totalorder %s13, 0
      %p28 = por %p26, %p27
      %p29 = scmp.ne.s32.totalorder %s21, %s23
      %p30 = scmp.eq.s32.totalorder %s18, 2
      %p31 = por %p29, %p30
      %p32 = scmp.ne.s32.totalorder %s23, %s24
      %p33 = scmp.eq.s32.totalorder %s18, 0
      %p34 = por %p32, %p33
      %p35 = scmp.ne.s32.totalorder %s23, %s24
      %p36 = scmp.eq.s32.totalorder %s19, 2
      %p37 = por %p35, %p36
      %p39 = scmp.ne.s32.totalorder %s24, %s38
      %p40 = scmp.eq.s32.totalorder %s19, 0
      %p41 = por %p39, %p40
      %s43 = sadd.s32 %s42, 1
      %p46 = scmp.eq.s32.totalorder %s13, 2
      %p47 = scmp.ne.s32.totalorder %s42, %s44
      %p48 = scmp.eq.s32.totalorder %s13, 0
      %p49 = por %p47, %p48
      %p50 = scmp.ne.s32.totalorder %s42, %s44
      %p51 = scmp.eq.s32.totalorder %s18, 2
      %p52 = por %p50, %p51
      %p53 = scmp.ne.s32.totalorder %s44, %s45
      %p54 = scmp.eq.s32.totalorder %s18, 0
      %p55 = por %p53, %p54
      %p56 = scmp.ne.s32.totalorder %s44, %s45
      %p57 = scmp.eq.s32.totalorder %s19, 2
      %p58 = por %p56, %p57
      %p60 = scmp.ne.s32.totalorder %s45, %s59
      %p61 = scmp.eq.s32.totalorder %s19, 0
      %p62 = por %p60, %p61
      %s64 = sadd.s32 %s63, 1
      %p67 = scmp.eq.s32.totalorder %s13, 2
      %p68 = scmp.ne.s32.totalorder %s63, %s65
      %p69 = scmp.eq.s32.totalorder %s13, 0
      %p70 = por %p68, %p69
      %p71 = scmp.ne.s32.totalorder %s63, %s65
      %p72 = scmp.eq.s32.totalorder %s18, 2
      %p73 = por %p71, %p72
      %p74 = scmp.ne.s32.totalorder %s65, %s66
      %p75 = scmp.eq.s32.totalorder %s18, 0
      %p76 = por %p74, %p75
      %p77 = scmp.ne.s32.totalorder %s65, %s66
      %p78 = scmp.eq.s32.totalorder %s19, 2
      %p79 = por %p77, %p78
      %p81 = scmp.ne.s32.totalorder %s66, %s80
      %p82 = scmp.eq.s32.totalorder %s19, 0
      %p83 = por %p81, %p82
      %s84 = ssub.s32 %s13, %s20
      %p85 = scmp.eq.s32.totalorder %s84, 0
      %s87 = sadd.s32 %s86, 1
      %s88 = scalar_select %p85, %s86, %s87
      %p91 = pneg %p85
      %p92 = scmp.eq.s32.totalorder %s13, 2
      %p93 = por %p91, %p92
      %p94 = scmp.ne.s32.totalorder %s86, %s89
      %p95 = scmp.eq.s32.totalorder %s13, 0
      %p96 = por %p94, %p95
      %p97 = scmp.ne.s32.totalorder %s86, %s89
      %p98 = scmp.eq.s32.totalorder %s18, 2
      %p99 = por %p97, %p98
      %p100 = scmp.ne.s32.totalorder %s89, %s90
      %p101 = scmp.eq.s32.totalorder %s18, 0
      %p102 = por %p100, %p101
      %p103 = scmp.ne.s32.totalorder %s89, %s90
      %p104 = scmp.eq.s32.totalorder %s19, 2
      %p105 = por %p103, %p104
      %p107 = scmp.ne.s32.totalorder %s90, %s106
      %p108 = scmp.eq.s32.totalorder %s19, 0
      %p109 = por %p107, %p108
      %s110 = ssub.s32 %s13, %s20
      %p111 = scmp.eq.s32.totalorder %s110, 0
      %s113 = sadd.s32 %s112, 1
      %s114 = scalar_select %p111, %s112, %s113
      %p117 = pneg %p111
      %p118 = scmp.eq.s32.totalorder %s13, 2
      %p119 = por %p117, %p118
      %p120 = scmp.ne.s32.totalorder %s112, %s115
      %p121 = scmp.eq.s32.totalorder %s13, 0
      %p122 = por %p120, %p121
      %p123 = scmp.ne.s32.totalorder %s112, %s115
      %p124 = scmp.eq.s32.totalorder %s18, 2
      %p125 = por %p123, %p124
      %p126 = scmp.ne.s32.totalorder %s115, %s116
      %p127 = scmp.eq.s32.totalorder %s18, 0
      %p128 = por %p126, %p127
      %p129 = scmp.ne.s32.totalorder %s115, %s116
      %p130 = scmp.eq.s32.totalorder %s19, 2
      %p131 = por %p129, %p130
      %p133 = scmp.ne.s32.totalorder %s116, %s132
      %p134 = scmp.eq.s32.totalorder %s19, 0
      %p135 = por %p133, %p134
      %s137 = sadd.s32 %s136, 1
      %p140 = scmp.eq.s32.totalorder %s13, 2
      %p141 = scmp.ne.s32.totalorder %s136, %s138
      %p142 = scmp.eq.s32.totalorder %s13, 0
      %p143 = por %p141, %p142
      %p144 = scmp.ne.s32.totalorder %s136, %s138
      %p145 = scmp.eq.s32.totalorder %s18, 2
      %p146 = por %p144, %p145
      %p147 = scmp.ne.s32.totalorder %s138, %s139
      %p148 = scmp.eq.s32.totalorder %s18, 0
      %p149 = por %p147, %p148
      %p150 = scmp.ne.s32.totalorder %s138, %s139
      %p151 = scmp.eq.s32.totalorder %s19, 2
      %p152 = por %p150, %p151
      %p154 = scmp.ne.s32.totalorder %s139, %s153
      %p155 = scmp.eq.s32.totalorder %s19, 0
      %p156 = por %p154, %p155
      %p157 = scmp.le.s32.totalorder 1, %s13
      %p158 = scmp.lt.s32.totalorder %s13, 4
      %p159 = pnand %p157, %p158
      %p160 = pneg %p159
      // Predicated region
      $region9: #{super_net_forward.1} parent=5 // pred_check
        _
      $region10: #{super_net_forward.1} parent=5 // pred_check_branch
        %162 = sbr.rel (%p159) target = $region12
      $region11: #{super_net_forward.1} parent=5 // pred_region
        %s163 = ssub.s32 %s13, 1
        // Predicated region
        $region13: #{super_net_forward.1} parent=11 // pred_check
          %p164 = pneg %p34
        $region14: #{super_net_forward.1} parent=11 // pred_check_branch
          %166 = sbr.rel (%p164) target = $region16
        $region15: #{super_net_forward.1} parent=11 // pred_region
          %168 = vsyncadd [#allocation5], 0
          %s170 = sshll.u32 %s0, 4
          %s171 = int_to_ptr.vmem [resolvable:$true] %s170
          %173 = dma.vmem_to_smem %s171, 16, [#allocation3], [#allocation5]
        $region16: #{super_net_forward.1} parent=11 // pred_fallthru
          _
        // Predicated region
        $region17: #{super_net_forward.1} parent=11 // pred_check
          %p174 = pneg %p55
        $region18: #{super_net_forward.1} parent=11 // pred_check_branch
          %176 = sbr.rel (%p174) target = $region20
        $region19: #{super_net_forward.1} parent=11 // pred_region
          _
        $region20: #{super_net_forward.1} parent=11 // pred_fallthru
          _
        // Predicated region
        $region21: #{super_net_forward.1} parent=11 // pred_check
          %p177 = pneg %p76
        $region22: #{super_net_forward.1} parent=11 // pred_check_branch
          %179 = sbr.rel (%p177) target = $region24
        $region23: #{super_net_forward.1} parent=11 // pred_region
          _
        $region24: #{super_net_forward.1} parent=11 // pred_fallthru
          _
      $region12: #{super_net_forward.1} parent=5 // pred_fallthru
        _
      %p180 = scmp.lt.s32.totalorder %s13, 3
      // Predicated region
      $region25: #{super_net_forward.1} parent=5 // pred_check
        %p181 = pneg %p180
      $region26: #{super_net_forward.1} parent=5 // pred_check_branch
        %183 = sbr.rel (%p181) target = $region28
      $region27: #{super_net_forward.1} parent=5 // pred_region
        // Predicated region
        $region29: #{super_net_forward.1} parent=27 // pred_check
          %p184 = pneg %p96
        $region30: #{super_net_forward.1} parent=27 // pred_check_branch
          %186 = sbr.rel (%p184) target = $region32
        $region31: #{super_net_forward.1} parent=27 // pred_region
          %p187 = scmp.lt.s32.totalorder %s13, 2
          %s188 = scalar_select %p187, %s13, 2
          %s189 = smul.addr %s188, 8
          %s190 = scalar_lea.vmem %s3, %s189
        $region32: #{super_net_forward.1} parent=27 // pred_fallthru
          _
        // Predicated region
        $region33: #{super_net_forward.1} parent=27 // pred_check
          %p191 = pneg %p122
        $region34: #{super_net_forward.1} parent=27 // pred_check_branch
          %193 = sbr.rel (%p191) target = $region36
        $region35: #{super_net_forward.1} parent=27 // pred_region
          %p194 = scmp.lt.s32.totalorder %s13, 2
          %s195 = scalar_select %p194, %s13, 2
          %s196 = smul.addr %s195, 4
          %s197 = smul.addr %s196, 8
          %s198 = scalar_lea.vmem %s4, %s197
        $region36: #{super_net_forward.1} parent=27 // pred_fallthru
          _
      $region28: #{super_net_forward.1} parent=5 // pred_fallthru
        _
      %p199 = scmp.le.s32.totalorder 1, %s13
      %p200 = scmp.lt.s32.totalorder %s13, 4
      %p201 = pnand %p199, %p200
      %p202 = pneg %p201
      // Predicated region
      $region37: #{super_net_forward.1} parent=5 // pred_check
        _
      $region38: #{super_net_forward.1} parent=5 // pred_check_branch
        %204 = sbr.rel (%p201) target = $region40
      $region39: #{super_net_forward.1} parent=5 // pred_region
        %s205 = ssub.s32 %s13, 1
        // Predicated region
        $region41: #{super_net_forward.1} parent=39 // pred_check
          %p206 = pneg %p34
        $region42: #{super_net_forward.1} parent=39 // pred_check_branch
          %208 = sbr.rel (%p206) target = $region44
        $region43: #{super_net_forward.1} parent=39 // pred_region
          %210 = dma.done [#allocation5], 16
        $region44: #{super_net_forward.1} parent=39 // pred_fallthru
          _
        %211 = sfence
        %p212 = pneg %p34
        %p213 = pneg %p31
        %p214 = pneg %p55
        %p215 = pneg %p52
        %p216 = pneg %p76
        %p217 = pneg %p73
        %p218 = scmp.lt.s32.totalorder %s18, 2
        %s219 = scalar_select %p218, %s18, 2
        %s220 = smul.addr %s219, 8
        %s221 = scalar_lea.vmem %s3, %s220
        %p222 = pneg %p102
        %p223 = pneg %p99
        %p224 = scmp.lt.s32.totalorder %s18, 2
        %s225 = scalar_select %p224, %s18, 2
        %s226 = smul.addr %s225, 4
        %s227 = smul.addr %s226, 8
        %s228 = scalar_lea.vmem %s4, %s227
        %p229 = pneg %p128
        %p230 = pneg %p125
        %p231 = pneg %p149
        %p232 = pneg %p146
        %p233 = scmp.lt.s32.totalorder %s18, 2
        %s234 = scalar_select %p233, %s18, 2
        %s235 = smul.addr %s234, 8
        %s236 = scalar_lea.vmem %s3, %s235
        %p237 = scmp.lt.s32.totalorder %s18, 2
        %s238 = scalar_select %p237, %s18, 2
        %s239 = smul.addr %s238, 4
        %s240 = smul.addr %s239, 8
        %s241 = scalar_lea.vmem %s4, %s240
        %p242 = scmp.eq.s32.totalorder %s18, 0
        // Predicated region
        $region45: #{super_net_forward.1} parent=39 // pred_check
          %p243 = pneg %p242
        $region46: #{super_net_forward.1} parent=39 // pred_check_branch
          %245 = sbr.rel (%p243) target = $region48
        $region47: #{super_net_forward.1} parent=39 // pred_region
          %v246 = vld [vmem:[%s1] sm:$0x3]
          %vm247 = vcmask 58368
          %248 = vst.msk [vmem:[#allocation2] sm:$0x3] %vm247, %v246
        $region48: #{super_net_forward.1} parent=39 // pred_fallthru
          _
        %s249 = sld [smem:[#allocation3]]
        %s250 = sld [smem:[#allocation3 + $0x1]]
        %v251 = vld [vmem:[#allocation2] sm:$0x3]
        %v252 = vld [vmem:[%s2] sm:$0x3]
        %v253 = vld [vmem:[%s241] sm:$0xff]
        %v254 = vld [vmem:[%s241 + $0x8] sm:$0xff]
        %v255 = vld [vmem:[%s241 + $0x10] sm:$0xff]
        %v256 = vld [vmem:[%s241 + $0x18] sm:$0xff]
        %vm257 = vcmask 261120
        %v259 = vsel %vm257, %v252, 0
        %261 = vmatpush.msra.mxu0 0.0
        %262 = vmatpush.msra.mxu0 0.0
        %263 = vmatpush.msra.mxu0 0.0
        %264 = vmatpush.msra.mxu0 0.0
        %265 = vmatpush.msra.mxu0 0.0
        %266 = vmatpush.msra.mxu0 0.0
        %267 = vmatpush.msra.mxu0 0.0
        %268 = vmatpush.msra.mxu0 0.0
        %269 = vmatpush.msra.mxu0 0.0
        %270 = vmatpush.msra.mxu0 0.0
        %271 = vmatpush.msra.mxu0 0.0
        %272 = vmatpush.msra.mxu0 0.0
        %273 = vmatpush.msra.mxu0 %v256
        %274 = vmatpush.msra.mxu0 %v255
        %275 = vmatpush.msra.mxu0 %v254
        %276 = vmatpush.msra.mxu0 %v253
        %277 = vmatmul.f32.gmra.mxu0 %v259
        %v278 = vpop.f32.mrf.mxu0
        %v279 = vadd.f32 0.0, %v278
        %280 = vdwg.mxu0
        %v281 = vld [vmem:[%s236] sm:$0xff]
        %v282 = vstv %s250
        %v283 = vmul.f32 %v282, %v251
        %vm284 = vcmask 64512
        %v286 = vsel %vm284, %v251, 0
        %288 = vmatpush.msra.mxu0 0.0
        %289 = vmatpush.msra.mxu0 0.0
        %290 = vmatpush.msra.mxu0 0.0
        %291 = vmatpush.msra.mxu0 0.0
        %292 = vmatpush.msra.mxu0 0.0
        %293 = vmatpush.msra.mxu0 0.0
        %294 = vmatpush.msra.mxu0 0.0
        %295 = vmatpush.msra.mxu0 0.0
        %296 = vmatpush.msra.mxu0 0.0
        %297 = vmatpush.msra.mxu0 0.0
        %298 = vmatpush.msra.mxu0 0.0
        %299 = vmatpush.msra.mxu0 0.0
        %300 = vmatpush.msra.mxu0 0.0
        %301 = vmatpush.msra.mxu0 0.0
        %302 = vmatpush.msra.mxu0 0.0
        %303 = vmatpush.msra.mxu0 %v281
        %304 = vmatmul.f32.gmra.mxu0 %v286
        %v305 = vpop.f32.mrf.mxu0
        %v306 = vadd.f32 %v283, %v305
        %307 = vdwg.mxu0
        %v308 = vstv %s249
        %v309 = vadd.f32 %v306, %v308
        %v310 = vadd.f32 %v309, 1.1920929e-07
        %v311 = vrcp.pop %v310
        %v312 = vmul.f32 %v310, %v311
        %v313 = vsub.f32 1.0, %v312
        %v314 = vmul.f32 %v311, %v313
        %v315 = vadd.f32 %v311, %v314
        %vm316 = vweird.f32 %v310
        %vm317 = vweird.f32 %v311
        %vm318 = vmor %vm316, %vm317
        %v319 = vsel %vm318, %v311, %v315
        %v320 = vand.u32 2147483647, %v310
        %vm321 = vcmp.eq.f32.partialorder %v320, 8.507059e+37
        %v322 = vand.u32 %v310, 2147483648
        %v323 = vor.u32 1.1754944e-38, %v322
        %v324 = vsel %vm321, %v323, %v319
        %v325 = vmul.f32 %v279, %v324
        %v326 = vmul.f32 %v325, %v251
        %vm327 = vcmask 58368
        %328 = vst.msk [vmem:[#allocation2] sm:$0x3] %vm327, %v326
        %329 = vst.msk [vmem:[#allocation6] sm:$0x3] %vm327, %v326
        // Predicated region
        $region49: #{super_net_forward.1} parent=39 // pred_check
          %p330 = pneg %p146
        $region50: #{super_net_forward.1} parent=39 // pred_check_branch
          %332 = sbr.rel (%p330) target = $region52
        $region51: #{super_net_forward.1} parent=39 // pred_region
          %334 = vsyncadd [#allocation4], 0
          %s336 = sshll.u32 [#allocation6], 4
          %s337 = int_to_ptr.vmem [resolvable:$true] %s336
          %s338 = sshll.u32 %s5, 4
          %s339 = int_to_ptr.hbm [resolvable:$true] %s338
          %341 = dma.vmem_to_hbm [thread:$0]  %s337, 32, %s339, [#allocation4]
        $region52: #{super_net_forward.1} parent=39 // pred_fallthru
          _
        // Predicated region
        $region53: #{super_net_forward.1} parent=39 // pred_check
          %p342 = pneg %p146
        $region54: #{super_net_forward.1} parent=39 // pred_check_branch
          %344 = sbr.rel (%p342) target = $region56
        $region55: #{super_net_forward.1} parent=39 // pred_region
          %346 = dma.done [#allocation4], 32
        $region56: #{super_net_forward.1} parent=39 // pred_fallthru
          _
      $region40: #{super_net_forward.1} parent=5 // pred_fallthru
        _
      %p347 = scmp.le.s32.totalorder 2, %s13
      // Predicated region
      $region57: #{super_net_forward.1} parent=5 // pred_check
        %p348 = pneg %p347
      $region58: #{super_net_forward.1} parent=5 // pred_check_branch
        %350 = sbr.rel (%p348) target = $region60
      $region59: #{super_net_forward.1} parent=5 // pred_region
        %s351 = ssub.s32 %s13, 2
      $region60: #{super_net_forward.1} parent=5 // pred_fallthru
        _
    $region6: #{super_net_forward.1} parent=1 // loop_footer
      %s17 = sadd.s32 1, %s13
    $region7: #{super_net_forward.1} parent=1 // loop_footer_branch
      %12 = sbr.rel target = $region3
    $region8: #{super_net_forward.1} parent=1 // loop_exit
      _
    %352 = vsyncpa [#allocation4], 1
    %s353 = scalar_lea.sflag [#allocation4], 1
    %354 = vsyncpa %s353, 1
    %355 = vsyncpa [#allocation5], 1
    %s356 = scalar_lea.sflag [#allocation5], 1
    %357 = vsyncpa %s356, 1

</llo_original>
